<compile_context>
chip_gen: v7x
topology: tpu7x:2x2x1
jax: 0.10.0
libtpu: 0.0.40
codegen_flags: <defaults>
</compile_context>

<pallas_src>
import functools

import jax
import jax.numpy as jnp
from jax.experimental import pallas as pl
from jax.experimental.pallas import tpu as pltpu


def _eca_kernel(x_ref, w_ref, o_ref, pool_ref, *, inv_hw, taps, pad, lp):
    """Fused ECA forward for one batch-block.

    x_ref:    (Nb, C, HW)        input images (native dtype); C on sublanes, HW on lanes.
    w_ref:    (k, C, 1)  f32     depthwise conv taps, constant across grid steps.
    o_ref:    (Nb, C, HW)        output, same dtype as x.
    pool_ref: (Nb, lp+C+pad, 1)  f32 scratch: channel-padded pooled vector.
    """
    c = x_ref.shape[1]
    xf = x_ref[...].astype(jnp.float32)

    # 1) Pool first: spatial mean over the lane axis (XLU reduce) -> (Nb, C, 1).
    pooled = jnp.sum(xf, axis=-1, keepdims=True) * inv_hw

    # 2) k-tap depthwise conv across channels on the tiny pooled vector.
    #    pooled is written into a zero-padded scratch at sublane offset `lp`
    #    (a multiple of 8 -> aligned store); tap t then reads the window starting
    #    at lp - pad + t, which realizes pooled[i + t - pad] with zeros outside
    #    [0, C) -- exactly unfold(padding=(0, pad)) + grouped Conv1d.
    if pad > 0:
        pool_ref[...] = jnp.zeros_like(pool_ref)
    pool_ref[:, lp:lp + c, :] = pooled

    gate_pre = w_ref[0] * pool_ref[:, lp - pad:lp - pad + c, :]
    for t in range(1, taps):                       # k is tiny & static -> unrolled
        off = lp - pad + t
        gate_pre = gate_pre + w_ref[t] * pool_ref[:, off:off + c, :]

    # 3) Sigmoid gate (exact; exp overflow saturates to gate=0, no NaN) and scale.
    #    For very large C, pl.reciprocal(1 + exp(-g), approx=True) would push the
    #    divide onto the otherwise-idle EUP slot.
    gate = 1.0 / (1.0 + jnp.exp(-gate_pre))                     # (Nb, C, 1)
    o_ref[...] = (xf * gate).astype(o_ref.dtype)                # lane-dense store


def _pick_batch_block(n, per_image_bytes):
    """Images per grid step: large enough (~1 MiB of input/step) to amortize the
    per-step pipeline overhead, small enough to stay far under scoped-VMEM defaults
    once double-buffered, and split into >=2 parallel steps for v7x's two
    TensorCores whenever the steps are not overhead-bound anyway."""
    target_bytes = 1 << 20
    max_nb = max(1, min(n, target_bytes // max(per_image_bytes, 1)))
    divisors = [d for d in range(1, n + 1) if n % d == 0]
    nb = max(d for d in divisors if d <= max_nb)
    if n >= 2 and n // nb == 1 and nb * per_image_bytes >= (256 << 10):
        nb = max(d for d in divisors if d <= max(1, nb // 2))
    return nb


def eca_forward(x, conv_weight):
    """ECALayer forward.
    x: (N, C, H, W), f32 or bf16.
    conv_weight: (C, 1, k) -- weight of nn.Conv1d(C, C, k, bias=False, groups=C)."""
    N, C, H, W = x.shape
    C_w, one, k = conv_weight.shape
    assert C_w == C and one == 1
    pad = (k - 1) // 2
    HW = H * W

    # Free contiguous reshape NCHW -> (N, C, H*W): no transpose, no padding, no copy.
    x3 = x.reshape(N, C, HW)
    # Tap stack (k, C, 1): w3[t, i, 0] = conv_weight[i, 0, t]  (tiny, f32).
    w3 = jnp.transpose(conv_weight.astype(jnp.float32), (2, 0, 1))

    nb = _pick_batch_block(N, C * HW * x.dtype.itemsize)
    lp = ((pad + 7) // 8) * 8            # 8-aligned left padding of the pooled scratch

    kernel = functools.partial(_eca_kernel, inv_hw=1.0 / float(HW),
                               taps=k, pad=pad, lp=lp)
    out3 = pl.pallas_call(
        kernel,
        out_shape=jax.ShapeDtypeStruct((N, C, HW), x.dtype),
        grid_spec=pltpu.PrefetchScalarGridSpec(
            num_scalar_prefetch=0,
            grid=(N // nb,),
            in_specs=[
                pl.BlockSpec((nb, C, HW), lambda n: (n, 0, 0)),
                # Constant block index -> fetched once, resident across all steps.
                pl.BlockSpec((k, C, 1), lambda n: (0, 0, 0)),
            ],
            out_specs=pl.BlockSpec((nb, C, HW), lambda n: (n, 0, 0)),
            scratch_shapes=[pltpu.VMEM((nb, lp + C + pad, 1), jnp.float32)],
        ),
        compiler_params=pltpu.CompilerParams(
            dimension_semantics=("parallel",)),
    )(x3, w3)
    return out3.reshape(N, C, H, W)


def eca_reference(x, conv_weight):
    """Pure-JAX replica of the PyTorch ECALayer.forward (validation only)."""
    N, C, H, W = x.shape
    k = conv_weight.shape[-1]
    pad = (k - 1) // 2
    pooled = jnp.mean(x.astype(jnp.float32), axis=(2, 3))        # AdaptiveAvgPool2d(1)
    p_pad = jnp.pad(pooled, ((0, 0), (pad, pad)))                # unfold zero padding
    idx = jnp.arange(C)[:, None] + jnp.arange(k)[None, :]        # (C, k)
    windows = p_pad[:, idx]                                      # (N, C, k)
    gate_pre = jnp.einsum("nck,ck->nc", windows,
                          conv_weight[:, 0, :].astype(jnp.float32))  # grouped Conv1d
    gate = jax.nn.sigmoid(gate_pre)
    return x.astype(jnp.float32) * gate[:, :, None, None]


if __name__ == "__main__":
    # Small deterministic example consistent with the module:
    # x: (batch=2, channels=16, 16x16 spatial); Conv1d kernel size 3.
    N, C, H, W = 2, 16, 16, 16
    k_size = 3

    key = jax.random.PRNGKey(0)
    kx, kw = jax.random.split(key)
    x = jax.random.normal(kx, (N, C, H, W), dtype=jnp.float32)
    # nn.Conv1d(C, C, k_size, bias=False, groups=C) weight has shape (C, 1, k).
    conv_w = jax.random.normal(kw, (C, 1, k_size), dtype=jnp.float32) / jnp.sqrt(k_size)

    out = jax.block_until_ready(eca_forward(x, conv_w))
    assert out.shape == (N, C, H, W) and out.dtype == x.dtype
    ref = eca_reference(x, conv_w)
    err = float(jnp.max(jnp.abs(out - ref)))
    # Pool-first + exact sigmoid keeps the kernel at f32-rounding accuracy.
    assert err < 1e-5, f"f32 max abs err {err}"

    # bf16 I/O path (review item): HBM traffic in bf16, in-kernel math in f32 (v5e-safe).
    xb = x.astype(jnp.bfloat16)
    outb = jax.block_until_ready(eca_forward(xb, conv_w))
    assert outb.dtype == jnp.bfloat16
    errb = float(jnp.max(jnp.abs(outb.astype(jnp.float32) - eca_reference(xb, conv_w))))
    assert errb < 5e-2, f"bf16 max abs err {errb}"   # dominated by bf16 output rounding

    print("KERNEL_OK")
</pallas_src>

<mosaic_0001>
module attributes {stable_mosaic.version = 11 : i64} {
  func.func @_eca_kernel(%arg0: i32, %arg1: memref<2x16x256xf32, #tpu.memory_space<vmem>>, %arg2: memref<3x16x1xf32, #tpu.memory_space<vmem>>, %arg3: memref<2x16x256xf32, #tpu.memory_space<vmem>>, %arg4: memref<2x25x1xf32, #tpu.memory_space<vmem>>) attributes {dimension_semantics = [#tpu.dimension_semantics<parallel>], iteration_bounds = array<i64: 1>, scalar_prefetch = 0 : i64, scratch_operands = 1 : i64, tpu.core_type = #tpu.core_type<tc>, window_params = [{transform_indices = @transform_0, window_bounds = array<i64: 2, 16, 256>}, {pipeline_mode = #tpu.pipeline_mode<synchronous>, transform_indices = @transform_1, window_bounds = array<i64: 3, 16, 1>}, {transform_indices = @transform_2, window_bounds = array<i64: 2, 16, 256>}]} {
    %c0 = arith.constant 0 : index
    %c0_0 = arith.constant 0 : index
    %c0_1 = arith.constant 0 : index
    %0 = vector.load %arg1[%c0, %c0_0, %c0_1] : memref<2x16x256xf32, #tpu.memory_space<vmem>>, vector<2x16x256xf32>
    %cst = arith.constant dense<0.000000e+00> : vector<2x16xf32>
    %1 = vector.multi_reduction <add>, %0, %cst [2] : vector<2x16x256xf32> to vector<2x16xf32>
    %2 = vector.shape_cast %1 : vector<2x16xf32> to vector<2x16x1xf32>
    %cst_2 = arith.constant 3.906250e-03 : f32
    %3 = vector.broadcast %cst_2 : f32 to vector<2x16x1xf32>
    %4 = arith.mulf %2, %3 : vector<2x16x1xf32>
    %cst_3 = arith.constant 0.000000e+00 : f32
    %5 = vector.broadcast %cst_3 : f32 to vector<2x25x1xf32>
    %c0_4 = arith.constant 0 : index
    %c0_5 = arith.constant 0 : index
    %c0_6 = arith.constant 0 : index
    %6 = vector.load %arg4[%c0_4, %c0_5, %c0_6] : memref<2x25x1xf32, #tpu.memory_space<vmem>>, vector<2x25x1xf32>
    tpu.vector_store %arg4[%c0_4, %c0_5, %c0_6], %5 {strides = array<i32>} : memref<2x25x1xf32, #tpu.memory_space<vmem>>, vector<2x25x1xf32>,
    %c0_7 = arith.constant 0 : index
    %c8 = arith.constant 8 : index
    %c0_8 = arith.constant 0 : index
    %7 = vector.load %arg4[%c0_7, %c8, %c0_8] : memref<2x25x1xf32, #tpu.memory_space<vmem>>, vector<2x16x1xf32>
    tpu.vector_store %arg4[%c0_7, %c8, %c0_8], %4 {strides = array<i32>} : memref<2x25x1xf32, #tpu.memory_space<vmem>>, vector<2x16x1xf32>,
    %c0_9 = arith.constant 0 : index
    %c0_10 = arith.constant 0 : index
    %c0_11 = arith.constant 0 : index
    %8 = vector.load %arg2[%c0_9, %c0_10, %c0_11] : memref<3x16x1xf32, #tpu.memory_space<vmem>>, vector<1x16x1xf32>
    %9 = vector.shape_cast %8 : vector<1x16x1xf32> to vector<16x1xf32>
    %c0_12 = arith.constant 0 : index
    %c7 = arith.constant 7 : index
    %c0_13 = arith.constant 0 : index
    %10 = vector.load %arg4[%c0_12, %c7, %c0_13] : memref<2x25x1xf32, #tpu.memory_space<vmem>>, vector<2x16x1xf32>
    %11 = vector.shape_cast %9 : vector<16x1xf32> to vector<1x16x1xf32>
    %12 = vector.broadcast %11 : vector<1x16x1xf32> to vector<2x16x1xf32>
    %13 = arith.mulf %12, %10 : vector<2x16x1xf32>
    %c1 = arith.constant 1 : index
    %c0_14 = arith.constant 0 : index
    %c0_15 = arith.constant 0 : index
    %14 = vector.load %arg2[%c1, %c0_14, %c0_15] : memref<3x16x1xf32, #tpu.memory_space<vmem>>, vector<1x16x1xf32>
    %15 = vector.shape_cast %14 : vector<1x16x1xf32> to vector<16x1xf32>
    %c0_16 = arith.constant 0 : index
    %c8_17 = arith.constant 8 : index
    %c0_18 = arith.constant 0 : index
    %16 = vector.load %arg4[%c0_16, %c8_17, %c0_18] : memref<2x25x1xf32, #tpu.memory_space<vmem>>, vector<2x16x1xf32>
    %17 = vector.shape_cast %15 : vector<16x1xf32> to vector<1x16x1xf32>
    %18 = vector.broadcast %17 : vector<1x16x1xf32> to vector<2x16x1xf32>
    %19 = arith.mulf %18, %16 : vector<2x16x1xf32>
    %20 = arith.addf %13, %19 : vector<2x16x1xf32>
    %c2 = arith.constant 2 : index
    %c0_19 = arith.constant 0 : index
    %c0_20 = arith.constant 0 : index
    %21 = vector.load %arg2[%c2, %c0_19, %c0_20] : memref<3x16x1xf32, #tpu.memory_space<vmem>>, vector<1x16x1xf32>
    %22 = vector.shape_cast %21 : vector<1x16x1xf32> to vector<16x1xf32>
    %c0_21 = arith.constant 0 : index
    %c9 = arith.constant 9 : index
    %c0_22 = arith.constant 0 : index
    %23 = vector.load %arg4[%c0_21, %c9, %c0_22] : memref<2x25x1xf32, #tpu.memory_space<vmem>>, vector<2x16x1xf32>
    %24 = vector.shape_cast %22 : vector<16x1xf32> to vector<1x16x1xf32>
    %25 = vector.broadcast %24 : vector<1x16x1xf32> to vector<2x16x1xf32>
    %26 = arith.mulf %25, %23 : vector<2x16x1xf32>
    %27 = arith.addf %20, %26 : vector<2x16x1xf32>
    %cst_23 = arith.constant 0.000000e+00 : f32
    %28 = vector.broadcast %cst_23 : f32 to vector<2x16x1xf32>
    %29 = arith.subf %28, %27 : vector<2x16x1xf32>
    %30 = math.exp %29 : vector<2x16x1xf32>
    %cst_24 = arith.constant 1.000000e+00 : f32
    %31 = vector.broadcast %cst_24 : f32 to vector<2x16x1xf32>
    %32 = arith.addf %31, %30 : vector<2x16x1xf32>
    %cst_25 = arith.constant 1.000000e+00 : f32
    %33 = vector.broadcast %cst_25 : f32 to vector<2x16x1xf32>
    %34 = arith.divf %33, %32 : vector<2x16x1xf32>
    %35 = vector.broadcast %34 : vector<2x16x1xf32> to vector<2x16x256xf32>
    %36 = arith.mulf %0, %35 : vector<2x16x256xf32>
    %c0_26 = arith.constant 0 : index
    %c0_27 = arith.constant 0 : index
    %c0_28 = arith.constant 0 : index
    %37 = vector.load %arg3[%c0_26, %c0_27, %c0_28] : memref<2x16x256xf32, #tpu.memory_space<vmem>>, vector<2x16x256xf32>
    tpu.vector_store %arg3[%c0_26, %c0_27, %c0_28], %36 {strides = array<i32>} : memref<2x16x256xf32, #tpu.memory_space<vmem>>, vector<2x16x256xf32>,
    return
  }
  func.func @transform_0(%arg0: i32) -> (i32, i32, i32) {
    %c0_i32 = arith.constant 0 : i32
    %c0_i32_0 = arith.constant 0 : i32
    %c0_i32_1 = arith.constant 0 : i32
    return %arg0, %c0_i32, %c0_i32_0 : i32, i32, i32
  }
  func.func @transform_1(%arg0: i32) -> (i32, i32, i32) {
    %c0_i32 = arith.constant 0 : i32
    %c0_i32_0 = arith.constant 0 : i32
    %c0_i32_1 = arith.constant 0 : i32
    %c0_i32_2 = arith.constant 0 : i32
    return %c0_i32, %c0_i32_0, %c0_i32_1 : i32, i32, i32
  }
  func.func @transform_2(%arg0: i32) -> (i32, i32, i32) {
    %c0_i32 = arith.constant 0 : i32
    %c0_i32_0 = arith.constant 0 : i32
    %c0_i32_1 = arith.constant 0 : i32
    return %arg0, %c0_i32, %c0_i32_0 : i32, i32, i32
  }
}

</mosaic_0001>

<llo_original>
// kernel: tpu_custom_call.1
$region0: #{tpu_custom_call.1}
  #allocation0 [shape = 'u32[]', space=smem, size = 0x4, offset = 0x4, fixed_abs, tag = 'smem constant byte address 0x4 - core index']
  #allocation1 [shape = 'u32[144,128]{1,0:T(1,128)}', space=vmem, size = 0x12000, scoped, tag = 'internal scratch']
  #allocation2 [shape = 'f32[2,25,1]{2,1,0:T(8,128)}', space=vmem, size = 0x8000, scoped, tag = 'scratch operand']
  %s0 = inlined_call_operand.hbm [shape: f32[2,16,256], index: 0, kind: input, shape index: {}]
  %s1 = inlined_call_operand.vmem [shape: f32[3,16,1], index: 1, kind: input, shape index: {}]
  %s2 = inlined_call_operand.hbm [shape: f32[2,16,256], index: 2, kind: output, shape index: {}]
  %s3 = sld [smem:[#allocation0]]
  $region22: #{tpu_custom_call.1} parent=0
    _
  %s5 = ssub.s32 1, %s3
  %s6 = scalar_select 0, %s5, %s3
  $region1: #{tpu_custom_call.1} parent=0
    #allocation3 [shape = 'u8[32768]{0}', space=vmem, size = 0x8000, scoped, tag = 'input window, operand 0, single buffered']
    #allocation4 [shape = 's32[1]{0}', space=sflag, size = 0x4, scoped, tag = 'scoped memory for tpu_custom_call.1']
    #allocation5 [shape = 's32[1]{0}', space=sflag, size = 0x4, scoped, tag = 'scoped memory for tpu_custom_call.1']
    #allocation6 [shape = 'u8[32768]{0}', space=vmem, size = 0x8000, scoped, tag = 'output window, operand 0, single buffered']
    %7 = vsyncpa [#allocation4], 0
    %8 = vsyncpa [#allocation5], 0
    // Predicated region
    $region2: #{tpu_custom_call.1} parent=1 // pred_check
      _
    $region3: #{tpu_custom_call.1} parent=1 // pred_check_branch
      %10 = sbr.rel (0) target = $region5
    $region4: #{tpu_custom_call.1} parent=1 // pred_region
      %s12 = ssub.s32 1024, 1024
      %13 = vsyncadd [#allocation4], %s12
      %s14 = sshll.u32 [#allocation3], 4
      %s15 = int_to_ptr.vmem [resolvable:$true] %s14
      %20 = dma.hbm_to_vmem [thread:$0]  %s0, 1024, %s15, [#allocation4], 256, 256, 16
    $region5: #{tpu_custom_call.1} parent=1 // pred_fallthru
      _
    // Predicated region
    $region6: #{tpu_custom_call.1} parent=1 // pred_check
      _
    $region7: #{tpu_custom_call.1} parent=1 // pred_check_branch
      %22 = sbr.rel (0) target = $region9
    $region8: #{tpu_custom_call.1} parent=1 // pred_region
      _
    $region9: #{tpu_custom_call.1} parent=1 // pred_fallthru
      _
    // Predicated region
    $region10: #{tpu_custom_call.1} parent=1 // pred_check
      _
    $region11: #{tpu_custom_call.1} parent=1 // pred_check_branch
      %24 = sbr.rel (0) target = $region13
    $region12: #{tpu_custom_call.1} parent=1 // pred_region
      %25 = dma.done [#allocation4], 1024
    $region13: #{tpu_custom_call.1} parent=1 // pred_fallthru
      _
    %v26 = vld [vmem:[#allocation3] sm:$0xff]
    %v27 = vld [vmem:[#allocation3 + $0x8] sm:$0xff]
    %v28 = vld [vmem:[#allocation3 + $0x10] sm:$0xff]
    %v29 = vld [vmem:[#allocation3 + $0x18] sm:$0xff]
    %v30 = vld [vmem:[#allocation3 + $0x20] sm:$0xff]
    %v31 = vld [vmem:[#allocation3 + $0x28] sm:$0xff]
    %v32 = vld [vmem:[#allocation3 + $0x30] sm:$0xff]
    %v33 = vld [vmem:[#allocation3 + $0x38] sm:$0xff]
    %v34 = vadd.f32 %v26, %v27
    %35 = vadd.xlane.f32.xlu0 %v34
    %v36 = vpop.xlane.xlu0 %35
    %v37 = vadd.f32 %v28, %v29
    %38 = vadd.xlane.f32.xlu0 %v37
    %v39 = vpop.xlane.xlu0 %38
    %v40 = vadd.f32 %v30, %v31
    %41 = vadd.xlane.f32.xlu0 %v40
    %v42 = vpop.xlane.xlu0 %41
    %v43 = vadd.f32 %v32, %v33
    %44 = vadd.xlane.f32.xlu0 %v43
    %v45 = vpop.xlane.xlu0 %44
    %v46 = vmul.f32 %v36, 0.00390625
    %v47 = vmul.f32 %v39, 0.00390625
    %v48 = vmul.f32 %v42, 0.00390625
    %v49 = vmul.f32 %v45, 0.00390625
    %vm50 = vcmask 7168
    %51 = vst.msk [vmem:[#allocation2] sm:$0xff] %vm50, 0.0
    %52 = vst.msk [vmem:[#allocation2 + $0x8] sm:$0xff] %vm50, 0.0
    %53 = vst.msk [vmem:[#allocation2 + $0x10] sm:$0xff] %vm50, 0.0
    %vm54 = vcmask 0
    %55 = vst.msk [vmem:[#allocation2 + $0x18] sm:$0x1] %vm54, 0.0
    %56 = vst.msk [vmem:[#allocation2 + $0x20] sm:$0xff] %vm50, 0.0
    %57 = vst.msk [vmem:[#allocation2 + $0x28] sm:$0xff] %vm50, 0.0
    %58 = vst.msk [vmem:[#allocation2 + $0x30] sm:$0xff] %vm50, 0.0
    %59 = vst.msk [vmem:[#allocation2 + $0x38] sm:$0x1] %vm54, 0.0
    %60 = vst.msk [vmem:[#allocation2 + $0x8] sm:$0xff] %vm50, %v46
    %61 = vst.msk [vmem:[#allocation2 + $0x10] sm:$0xff] %vm50, %v47
    %62 = vst.msk [vmem:[#allocation2 + $0x28] sm:$0xff] %vm50, %v48
    %63 = vst.msk [vmem:[#allocation2 + $0x30] sm:$0xff] %vm50, %v49
    %v64 = vld [vmem:[%s1] sm:$0xff]
    %v65 = vld [vmem:[%s1 + $0x8] sm:$0xff]
    %v66 = vld [vmem:[#allocation2 + $0x7] sm:$0xff]
    %v67 = vld [vmem:[#allocation2 + $0xf] sm:$0xff]
    %v68 = vld [vmem:[#allocation2 + $0x27] sm:$0xff]
    %v69 = vld [vmem:[#allocation2 + $0x2f] sm:$0xff]
    %v70 = vmul.f32 %v64, %v66
    %v71 = vmul.f32 %v65, %v67
    %v72 = vmul.f32 %v64, %v68
    %v73 = vmul.f32 %v65, %v69
    %s74 = scalar_lea.vmem %s1, 16
    %v75 = vld [vmem:[%s74] sm:$0xff]
    %v76 = vld [vmem:[%s74 + $0x8] sm:$0xff]
    %v77 = vld [vmem:[#allocation2 + $0x8] sm:$0xff]
    %v78 = vld [vmem:[#allocation2 + $0x10] sm:$0xff]
    %v79 = vld [vmem:[#allocation2 + $0x28] sm:$0xff]
    %v80 = vld [vmem:[#allocation2 + $0x30] sm:$0xff]
    %v81 = vmul.f32 %v75, %v77
    %v82 = vmul.f32 %v76, %v78
    %v83 = vmul.f32 %v75, %v79
    %v84 = vmul.f32 %v76, %v80
    %v85 = vadd.f32 %v70, %v81
    %v86 = vadd.f32 %v71, %v82
    %v87 = vadd.f32 %v72, %v83
    %v88 = vadd.f32 %v73, %v84
    %s89 = scalar_lea.vmem %s1, 32
    %v90 = vld [vmem:[%s89] sm:$0xff]
    %v91 = vld [vmem:[%s89 + $0x8] sm:$0xff]
    %v92 = vld [vmem:[#allocation2 + $0x9] sm:$0xff]
    %v93 = vld [vmem:[#allocation2 + $0x11] sm:$0xff]
    %v94 = vld [vmem:[#allocation2 + $0x29] sm:$0xff]
    %v95 = vld [vmem:[#allocation2 + $0x31] sm:$0xff]
    %v96 = vmul.f32 %v90, %v92
    %v97 = vmul.f32 %v91, %v93
    %v98 = vmul.f32 %v90, %v94
    %v99 = vmul.f32 %v91, %v95
    %v100 = vadd.f32 %v85, %v96
    %v101 = vadd.f32 %v86, %v97
    %v102 = vadd.f32 %v87, %v98
    %v103 = vadd.f32 %v88, %v99
    %v104 = vsub.f32 0.0, %v100
    %v105 = vsub.f32 0.0, %v101
    %v106 = vsub.f32 0.0, %v102
    %v107 = vsub.f32 0.0, %v103
    %v108 = vmul.f32 %v104, 1.442695
    %v109 = vpow.pop %v108
    %v110 = vmul.f32 %v105, 1.442695
    %v111 = vpow.pop %v110
    %v112 = vmul.f32 %v106, 1.442695
    %v113 = vpow.pop %v112
    %v114 = vmul.f32 %v107, 1.442695
    %v115 = vpow.pop %v114
    %v116 = vadd.f32 %v109, 1.0
    %v117 = vadd.f32 %v111, 1.0
    %v118 = vadd.f32 %v113, 1.0
    %v119 = vadd.f32 %v115, 1.0
    %v120 = vrcp.pop %v116
    %v121 = vmul.f32 1.0, %v120
    %v122 = vrcp.pop %v117
    %v123 = vmul.f32 1.0, %v122
    %v124 = vrcp.pop %v118
    %v125 = vmul.f32 1.0, %v124
    %v126 = vrcp.pop %v119
    %v127 = vmul.f32 1.0, %v126
    %129 = vset.pattern.permute.xlu0 0
    %130 = vperm.xlu0 %129, %v121
    %v131 = vpop.permute.xlu0 %130
    %134 = vset.pattern.permute.xlu0 0
    %135 = vperm.xlu0 %134, %v123
    %v136 = vpop.permute.xlu0 %135
    %139 = vset.pattern.permute.xlu0 0
    %140 = vperm.xlu0 %139, %v125
    %v141 = vpop.permute.xlu0 %140
    %144 = vset.pattern.permute.xlu0 0
    %145 = vperm.xlu0 %144, %v127
    %v146 = vpop.permute.xlu0 %145
    %v148 = vmul.f32 %v26, %v131
    %v149 = vmul.f32 %v27, %v131
    %v150 = vmul.f32 %v28, %v136
    %v151 = vmul.f32 %v29, %v136
    %v152 = vmul.f32 %v30, %v141
    %v153 = vmul.f32 %v31, %v141
    %v154 = vmul.f32 %v32, %v146
    %v155 = vmul.f32 %v33, %v146
    %156 = vst [vmem:[#allocation6] sm:$0xff] %v148
    %157 = vst [vmem:[#allocation6 + $0x8] sm:$0xff] %v149
    %158 = vst [vmem:[#allocation6 + $0x10] sm:$0xff] %v150
    %159 = vst [vmem:[#allocation6 + $0x18] sm:$0xff] %v151
    %160 = vst [vmem:[#allocation6 + $0x20] sm:$0xff] %v152
    %161 = vst [vmem:[#allocation6 + $0x28] sm:$0xff] %v153
    %162 = vst [vmem:[#allocation6 + $0x30] sm:$0xff] %v154
    %163 = vst [vmem:[#allocation6 + $0x38] sm:$0xff] %v155
    // Predicated region
    $region14: #{tpu_custom_call.1} parent=1 // pred_check
      _
    $region15: #{tpu_custom_call.1} parent=1 // pred_check_branch
      %165 = sbr.rel (0) target = $region17
    $region16: #{tpu_custom_call.1} parent=1 // pred_region
      %s167 = ssub.s32 1024, 1024
      %168 = vsyncadd [#allocation5], %s167
      %s169 = sshll.u32 [#allocation6], 4
      %s170 = int_to_ptr.vmem [resolvable:$true] %s169
      %175 = dma.vmem_to_hbm [thread:$0]  %s170, 1024, %s2, [#allocation5], 256, 256, 16
    $region17: #{tpu_custom_call.1} parent=1 // pred_fallthru
      _
    // Predicated region
    $region18: #{tpu_custom_call.1} parent=1 // pred_check
      _
    $region19: #{tpu_custom_call.1} parent=1 // pred_check_branch
      %177 = sbr.rel (0) target = $region21
    $region20: #{tpu_custom_call.1} parent=1 // pred_region
      %178 = dma.done [#allocation5], 1024
    $region21: #{tpu_custom_call.1} parent=1 // pred_fallthru
      _
    %179 = vsyncpa [#allocation4], 1
    %180 = vsyncpa [#allocation5], 1

</llo_original>
